<compile_context>
chip_gen: v5e
topology: v5e:2x2
jax: 0.10.0
libtpu: 0.0.40
codegen_flags: <defaults>
</compile_context>

<pallas_src>
import numpy as np

import jax
import jax.numpy as jnp
from jax.experimental import pallas as pl
from jax.experimental.pallas import tpu as pltpu


def _round_up(x: int, m: int) -> int:
    return (x + m - 1) // m * m


def _linear_heads_kernel(x_ref, w_ref, b_ref, o_ref):
    # x_ref: [TB, K], w_ref: [K, N], b_ref: [1, N] (f32), o_ref: [TB, N]
    acc = jnp.dot(x_ref[...], w_ref[...], preferred_element_type=jnp.float32)
    o_ref[...] = (acc + b_ref[...]).astype(o_ref.dtype)


def init_linear_heads(heads, *, param_dtype=jnp.float32):
    """Pack one or more nn.Linear heads (sharing the same input) ONCE at init.

    heads: list of (weight [n_out, K] torch-layout, bias [n_out]).
    Returns (w_packed [K, N_total] param_dtype, b_packed [1, N_total] f32,
             out_dims tuple).  Transpose / concat / dtype cast happen here,
    NOT per forward call.
    """
    ws, bs, dims = [], [], []
    k_ref = None
    for w, b in heads:
        n_out, k = w.shape
        assert k_ref is None or k == k_ref, "all fused heads must share input dim"
        k_ref = k
        ws.append(jnp.asarray(w, param_dtype).T)      # [K, n_out]
        bs.append(jnp.asarray(b, jnp.float32))        # bias stays f32
        dims.append(n_out)
    w_packed = jnp.concatenate(ws, axis=1)
    b_packed = jnp.concatenate(bs)[None, :]
    return w_packed, b_packed, tuple(dims)


def linear_heads_forward(feature, w_packed, b_packed, out_dims, *,
                         block_b=1024, out_dtype=None, core_parallel=False):
    """feature: [B, K].  Returns a tuple of per-head outputs [B, n_out_i]."""
    B, K = feature.shape
    Kw, N = w_packed.shape
    assert Kw == K, f"feature K={K} vs packed weight K={Kw}"
    assert sum(out_dims) == N
    out_dtype = feature.dtype if out_dtype is None else out_dtype

    # Batch tiling: minimize padding (only to a multiple of 8 within the chosen
    # step count), never a full extra tile of zeros.
    n_steps = pl.cdiv(B, block_b)
    TB = _round_up(pl.cdiv(B, n_steps), 8)
    Bp = n_steps * TB
    x = feature if Bp == B else jnp.pad(feature, ((0, Bp - B), (0, 0)))

    # Explicit scoped-VMEM limit derived from the actual tiles (v5e default is
    # only 16 MiB).  Generous 4x headroom, capped at v7x's 64 MiB physical.
    x_it = np.dtype(feature.dtype).itemsize
    w_it = np.dtype(w_packed.dtype).itemsize
    o_it = np.dtype(out_dtype).itemsize
    est = (2 * TB * K * x_it          # double-buffered activations
           + 2 * TB * N * o_it        # double-buffered output
           + 2 * (K * N * w_it + N * 4))  # resident weight + bias budget
    vmem_limit = int(min(64 << 20, max(16 << 20, 4 * est)))

    # v7x: only CORE_PARALLEL actually shards the grid across its two
    # TensorCores; keep the safe "arbitrary" path when there's a single step.
    if core_parallel and n_steps > 1:
        dims_sem = (pltpu.CORE_PARALLEL,)
    else:
        dims_sem = ("arbitrary",)

    out = pl.pallas_call(
        _linear_heads_kernel,
        out_shape=jax.ShapeDtypeStruct((Bp, N), out_dtype),
        grid=(n_steps,),
        in_specs=[
            pl.BlockSpec((TB, K), lambda i: (i, 0)),   # activations: tiled over batch
            pl.BlockSpec((K, N), lambda i: (0, 0)),    # packed weight: VMEM-resident
            pl.BlockSpec((1, N), lambda i: (0, 0)),    # packed bias:   VMEM-resident
        ],
        out_specs=pl.BlockSpec((TB, N), lambda i: (i, 0)),
        compiler_params=pltpu.CompilerParams(
            dimension_semantics=dims_sem,
            vmem_limit_bytes=vmem_limit),
    )(x, w_packed, b_packed)

    if Bp != B:
        out = out[:B]
    if len(out_dims) == 1:                              # no slice for single head
        return (out,)
    outs, off = [], 0
    for d in out_dims:
        outs.append(out[:, off:off + d])
        off += d
    return tuple(outs)


# --- location_aware (NegModels.rl) convenience wrappers -----------------------

def init_location_aware(weight, bias, *, param_dtype=jnp.float32):
    """weight: [n_rl, n_input] (nn.Linear convention), bias: [n_rl]."""
    w_packed, b_packed, dims = init_linear_heads([(weight, bias)],
                                                 param_dtype=param_dtype)
    return w_packed, b_packed, dims[0]


def location_aware_forward(feature, w_packed, b_packed, n_rl, **kwargs):
    (out,) = linear_heads_forward(feature, w_packed, b_packed, (n_rl,), **kwargs)
    return out


if __name__ == "__main__":
    key = jax.random.PRNGKey(0)
    B, n_feature, n_rl = 8, 32, 16

    ks = jax.random.split(key, 7)
    # Deterministic synthetic parameters (nn.Linear layouts).
    w_rl = jax.random.normal(ks[0], (n_rl, n_feature), dtype=jnp.float32) * 0.1
    b_rl = jax.random.normal(ks[1], (n_rl,), dtype=jnp.float32) * 0.1
    w_mt1 = jax.random.normal(ks[2], (1, n_feature), dtype=jnp.float32) * 0.1   # multi_task.fc1
    b_mt1 = jax.random.normal(ks[3], (1,), dtype=jnp.float32) * 0.1
    w_mt2 = jax.random.normal(ks[4], (2, n_feature), dtype=jnp.float32) * 0.1   # multi_task.fc2
    b_mt2 = jax.random.normal(ks[5], (2,), dtype=jnp.float32) * 0.1
    feature = jax.random.normal(ks[6], (B, n_feature), dtype=jnp.float32)

    # 1) Standalone location_aware head (original spec, exact f32 check).
    wp, bp, n_out = init_location_aware(w_rl, b_rl)
    rel_loc = jax.block_until_ready(location_aware_forward(feature, wp, bp, n_out))
    ref_rl = feature @ w_rl.T + b_rl
    assert rel_loc.shape == (B, n_rl)
    assert jnp.allclose(rel_loc, ref_rl, atol=1e-5, rtol=1e-5)

    # 2) Fused heads: rl + multi_task share `feature`, one pallas_call serves all.
    wph, bph, head_dims = init_linear_heads(
        [(w_rl, b_rl), (w_mt1, b_mt1), (w_mt2, b_mt2)])
    rel2, p_tiou, p_loc = linear_heads_forward(feature, wph, bph, head_dims)
    jax.block_until_ready((rel2, p_tiou, p_loc))
    assert jnp.allclose(rel2, ref_rl, atol=1e-5, rtol=1e-5)
    assert jnp.allclose(p_tiou, feature @ w_mt1.T + b_mt1, atol=1e-5, rtol=1e-5)
    assert jnp.allclose(p_loc, feature @ w_mt2.T + b_mt2, atol=1e-5, rtol=1e-5)

    print("KERNEL_OK")
</pallas_src>

<mosaic_0001>
module attributes {stable_mosaic.version = 11 : i64} {
  func.func @_linear_heads_kernel(%arg0: i32, %arg1: memref<8x32xf32, #tpu.memory_space<vmem>>, %arg2: memref<32x16xf32, #tpu.memory_space<vmem>>, %arg3: memref<1x16xf32, #tpu.memory_space<vmem>>, %arg4: memref<8x16xf32, #tpu.memory_space<vmem>>) attributes {dimension_semantics = [#tpu.dimension_semantics<arbitrary>], iteration_bounds = array<i64: 1>, scalar_prefetch = 0 : i64, scratch_operands = 0 : i64, tpu.core_type = #tpu.core_type<tc>, window_params = [{transform_indices = @transform_0, window_bounds = array<i64: 8, 32>}, {pipeline_mode = #tpu.pipeline_mode<synchronous>, transform_indices = @transform_1, window_bounds = array<i64: 32, 16>}, {pipeline_mode = #tpu.pipeline_mode<synchronous>, transform_indices = @transform_2, window_bounds = array<i64: 1, 16>}, {transform_indices = @transform_3, window_bounds = array<i64: 8, 16>}]} {
    %c0 = arith.constant 0 : index
    %c0_0 = arith.constant 0 : index
    %0 = vector.load %arg1[%c0, %c0_0] : memref<8x32xf32, #tpu.memory_space<vmem>>, vector<8x32xf32>
    %c0_1 = arith.constant 0 : index
    %c0_2 = arith.constant 0 : index
    %1 = vector.load %arg2[%c0_1, %c0_2] : memref<32x16xf32, #tpu.memory_space<vmem>>, vector<32x16xf32>
    %cst = arith.constant dense<0.000000e+00> : vector<8x16xf32>
    %2 = tpu.matmul %0, %1, %cst {dimension_numbers = #tpu.dot_dimension_numbers<[1], [0], [0], [1], [0, 0, 1, 1], [], []>} : vector<8x32xf32>, vector<32x16xf32>, vector<8x16xf32> -> vector<8x16xf32>
    %c0_3 = arith.constant 0 : index
    %c0_4 = arith.constant 0 : index
    %3 = vector.load %arg3[%c0_3, %c0_4] : memref<1x16xf32, #tpu.memory_space<vmem>>, vector<1x16xf32>
    %4 = vector.broadcast %3 : vector<1x16xf32> to vector<8x16xf32>
    %5 = arith.addf %2, %4 : vector<8x16xf32>
    %c0_5 = arith.constant 0 : index
    %c0_6 = arith.constant 0 : index
    %6 = vector.load %arg4[%c0_5, %c0_6] : memref<8x16xf32, #tpu.memory_space<vmem>>, vector<8x16xf32>
    tpu.vector_store %arg4[%c0_5, %c0_6], %5 {strides = array<i32>} : memref<8x16xf32, #tpu.memory_space<vmem>>, vector<8x16xf32>,
    return
  }
  func.func @transform_0(%arg0: i32) -> (i32, i32) {
    %c0_i32 = arith.constant 0 : i32
    %c0_i32_0 = arith.constant 0 : i32
    return %arg0, %c0_i32 : i32, i32
  }
  func.func @transform_1(%arg0: i32) -> (i32, i32) {
    %c0_i32 = arith.constant 0 : i32
    %c0_i32_0 = arith.constant 0 : i32
    %c0_i32_1 = arith.constant 0 : i32
    return %c0_i32, %c0_i32_0 : i32, i32
  }
  func.func @transform_2(%arg0: i32) -> (i32, i32) {
    %c0_i32 = arith.constant 0 : i32
    %c0_i32_0 = arith.constant 0 : i32
    %c0_i32_1 = arith.constant 0 : i32
    return %c0_i32, %c0_i32_0 : i32, i32
  }
  func.func @transform_3(%arg0: i32) -> (i32, i32) {
    %c0_i32 = arith.constant 0 : i32
    %c0_i32_0 = arith.constant 0 : i32
    return %arg0, %c0_i32 : i32, i32
  }
}

</mosaic_0001>

<llo_original>
// kernel: tpu_custom_call.1
$region0: #{tpu_custom_call.1}
  #allocation0 [shape = 'u32[]', space=smem, size = 0x4, offset = 0x4, fixed_abs, tag = 'smem constant byte address 0x4 - core index']
  #allocation1 [shape = 'u32[72,128]{1,0:T(1,128)}', space=vmem, size = 0x9000, scoped, tag = 'internal scratch']
  %s0 = inlined_call_operand.vmem [shape: f32[8,32], index: 0, kind: input, shape index: {}]
  %s1 = inlined_call_operand.vmem [shape: f32[32,16], index: 1, kind: input, shape index: {}]
  %s2 = inlined_call_operand.vmem [shape: f32[1,16], index: 2, kind: input, shape index: {}]
  %s3 = inlined_call_operand.hbm [shape: f32[8,16], index: 3, kind: output, shape index: {}]
  %s4 = sld [smem:[#allocation0]]
  $region22: #{tpu_custom_call.1} parent=0
    _
  %s6 = ssub.s32 1, %s4
  %s7 = scalar_select 0, %s6, %s4
  $region1: #{tpu_custom_call.1} parent=0
    #allocation2 [shape = 'u8[4096]{0}', space=vmem, size = 0x1000, scoped, tag = 'output window, operand 0, single buffered']
    #allocation3 [shape = 's32[1]{0}', space=sflag, size = 0x4, scoped, tag = 'scoped memory for tpu_custom_call.1']
    %8 = vsyncpa [#allocation3], 0
    // Predicated region
    $region2: #{tpu_custom_call.1} parent=1 // pred_check
      _
    $region3: #{tpu_custom_call.1} parent=1 // pred_check_branch
      %10 = sbr.rel (0) target = $region5
    $region4: #{tpu_custom_call.1} parent=1 // pred_region
      _
    $region5: #{tpu_custom_call.1} parent=1 // pred_fallthru
      _
    // Predicated region
    $region6: #{tpu_custom_call.1} parent=1 // pred_check
      _
    $region7: #{tpu_custom_call.1} parent=1 // pred_check_branch
      %12 = sbr.rel (0) target = $region9
    $region8: #{tpu_custom_call.1} parent=1 // pred_region
      _
    $region9: #{tpu_custom_call.1} parent=1 // pred_fallthru
      _
    // Predicated region
    $region10: #{tpu_custom_call.1} parent=1 // pred_check
      _
    $region11: #{tpu_custom_call.1} parent=1 // pred_check_branch
      %14 = sbr.rel (0) target = $region13
    $region12: #{tpu_custom_call.1} parent=1 // pred_region
      _
    $region13: #{tpu_custom_call.1} parent=1 // pred_fallthru
      _
    %v15 = vld [vmem:[%s0] sm:$0xff]
    %v16 = vld [vmem:[%s1] sm:$0xff]
    %v17 = vld [vmem:[%s1 + $0x8] sm:$0xff]
    %v18 = vld [vmem:[%s1 + $0x10] sm:$0xff]
    %v19 = vld [vmem:[%s1 + $0x18] sm:$0xff]
    %v20 = vld [vmem:[%s2] sm:$0x1]
    %v22 = vperm.slane %v20, 0
    %vm24 = vcmask 261120
    %v26 = vsel %vm24, %v15, 0
    %28 = vmatpush.msra.mxu0 0.0
    %29 = vmatpush.msra.mxu0 0.0
    %30 = vmatpush.msra.mxu0 0.0
    %31 = vmatpush.msra.mxu0 0.0
    %32 = vmatpush.msra.mxu0 0.0
    %33 = vmatpush.msra.mxu0 0.0
    %34 = vmatpush.msra.mxu0 0.0
    %35 = vmatpush.msra.mxu0 0.0
    %36 = vmatpush.msra.mxu0 0.0
    %37 = vmatpush.msra.mxu0 0.0
    %38 = vmatpush.msra.mxu0 0.0
    %39 = vmatpush.msra.mxu0 0.0
    %40 = vmatpush.msra.mxu0 %v19
    %41 = vmatpush.msra.mxu0 %v18
    %42 = vmatpush.msra.mxu0 %v17
    %43 = vmatpush.msra.mxu0 %v16
    %44 = vmatmul.f32.gmra.mxu0 %v26
    %v45 = vpop.f32.mrf.mxu0
    %v46 = vadd.f32 %v22, %v45
    %47 = vdwg.mxu0
    %vm48 = vcmask 130048
    %49 = vst.msk [vmem:[#allocation2] sm:$0xff] %vm48, %v46
    // Predicated region
    $region14: #{tpu_custom_call.1} parent=1 // pred_check
      _
    $region15: #{tpu_custom_call.1} parent=1 // pred_check_branch
      %51 = sbr.rel (0) target = $region17
    $region16: #{tpu_custom_call.1} parent=1 // pred_region
      %53 = vsyncadd [#allocation3], 0
      %s55 = sshll.u32 [#allocation2], 4
      %s56 = int_to_ptr.vmem [resolvable:$true] %s55
      %s57 = sshll.u32 %s3, 4
      %s58 = int_to_ptr.hbm [resolvable:$true] %s57
      %60 = dma.vmem_to_hbm [thread:$0]  %s56, 128, %s58, [#allocation3]
    $region17: #{tpu_custom_call.1} parent=1 // pred_fallthru
      _
    // Predicated region
    $region18: #{tpu_custom_call.1} parent=1 // pred_check
      _
    $region19: #{tpu_custom_call.1} parent=1 // pred_check_branch
      %62 = sbr.rel (0) target = $region21
    $region20: #{tpu_custom_call.1} parent=1 // pred_region
      %64 = dma.done [#allocation3], 128
    $region21: #{tpu_custom_call.1} parent=1 // pred_fallthru
      _
    %65 = vsyncpa [#allocation3], 1

</llo_original>
